<compile_context>
chip_gen: v6e
topology: v6e:2x2x1
jax: 0.10.0
libtpu: 0.0.40
codegen_flags: <defaults>
</compile_context>

<pallas_src>
import math

import jax
import jax.numpy as jnp
import numpy as np
from jax import lax
from jax.experimental import pallas as pl
from jax.experimental.pallas import tpu as pltpu  # noqa: F401  (TPU backend)

# ---------------- model hyper-params (small, DistilBERT-style) ----------------
B = 2            # batch
S = 8            # sequence length
D = 32           # hidden dim
H = 4            # attention heads
HD = D // H      # head dim
FF = 64          # feed-forward hidden dim
BS = B * S       # flattened token count
LN_EPS = 1e-12
NEG = -1e9
LANES = 128      # lane-padded width for the weight slab / output

# Row offsets of each weight block inside the packed (R_TOTAL, 128) slab (all multiples of 8).
R_QKV = 0
R_WO = R_QKV + D          # 32
R_W1 = R_WO + D           # 64
R_W2 = R_W1 + D           # 96
R_LN2 = R_W2 + FF         # 160  (diag(ln2_weight) block)
R_TOTAL = R_LN2 + D       # 192


def _layer_norm(v, w, b):
    # v: (N, D); w, b: (1, D)
    mu = jnp.mean(v, axis=-1, keepdims=True)
    var = jnp.mean((v - mu) ** 2, axis=-1, keepdims=True)
    return (v - mu) * lax.rsqrt(var + LN_EPS) * w + b


def _gelu_exact(x):
    # erf-based GELU (matches torch.nn.GELU / HF "gelu"); see TODO(synk) about the tanh/EUP form.
    return 0.5 * x * (1.0 + lax.erf(x * (1.0 / math.sqrt(2.0))))


def transformer_block_kernel(x_ref, mask_ref, w_ref, vec_ref, const_ref, out_ref):
    x = x_ref[...]                                     # (BS, D)
    vec = vec_ref[...]                                 # (8, 128) packed biases / LN vectors

    bqkv = vec[0:1, :]          # (1,128): [bq/sqrt(HD) | bk | bv | zeros]
    bo   = vec[1:2, 0:D]
    ln1w = vec[2:3, 0:D]
    ln1b = vec[3:4, 0:D]
    b1   = vec[4:5, :]          # (1,128), zeros beyond FF
    b2   = vec[5:6, 0:D]
    ln2b = vec[6:7, :]          # (1,128), zeros beyond D

    head_sel = const_ref[0:H * BS, 0:D]                # (H*BS, D) 0/1 head-column selector
    bias_c = const_ref[H * BS:2 * H * BS, 0:BS]        # (H*BS, BS) cross-batch -1e9 block bias

    # ---- fused QKV projection: one MXU matmul, 128-lane aligned output ----
    qkv = jnp.dot(x, w_ref[R_QKV:R_QKV + D, :],
                  preferred_element_type=jnp.float32) + bqkv           # (BS, 128)
    q = qkv[:, 0:D]
    k = qkv[:, D:2 * D]
    v = qkv[:, 2 * D:3 * D]

    # ---- all-head attention with two MXU matmuls (no per-head loop, no lane concats) ----
    q_big = jnp.broadcast_to(q, (H, BS, D)).reshape(H * BS, D) * head_sel   # (H*BS, D)
    scores = jnp.dot(q_big, k.T, preferred_element_type=jnp.float32)        # (H*BS, BS)
    scores = scores + bias_c + mask_ref[...]           # (1,BS) mask sublane-broadcasts for free
    m = jnp.max(scores, axis=-1, keepdims=True)
    e = jnp.exp(scores - m)
    p = e * pl.reciprocal(jnp.sum(e, axis=-1, keepdims=True), approx=True)
    ctx_big = jnp.dot(p, v, preferred_element_type=jnp.float32) * head_sel  # (H*BS, D)
    ctx = ctx_big[0:BS]
    for h in range(1, H):                              # tiny unrolled sublane-block sum
        ctx = ctx + ctx_big[h * BS:(h + 1) * BS]       # (BS, D)

    # ---- output projection + residual + LayerNorm ----
    attn = jnp.dot(ctx, w_ref[R_WO:R_WO + D, :], preferred_element_type=jnp.float32)
    h1 = _layer_norm(attn[:, 0:D] + bo + x, ln1w, ln1b)                     # (BS, D)

    # ---- position-wise FFN (exact GELU) + residual + LayerNorm ----
    ff = jnp.dot(h1, w_ref[R_W1:R_W1 + D, :], preferred_element_type=jnp.float32) + b1  # (BS,128)
    ff = _gelu_exact(ff)
    ff2 = jnp.dot(ff[:, 0:FF], w_ref[R_W2:R_W2 + FF, :], preferred_element_type=jnp.float32)
    pre2 = ff2[:, 0:D] + b2 + h1                                            # (BS, D)

    mu = jnp.mean(pre2, axis=-1, keepdims=True)
    var = jnp.mean((pre2 - mu) ** 2, axis=-1, keepdims=True)
    normed = (pre2 - mu) * lax.rsqrt(var + LN_EPS)
    # Final LN scale via diag-matrix matmul -> naturally 128-lane, zero-padded output slab
    # (full-width unmasked stores; wrapper slices back to D columns).
    out = jnp.dot(normed, w_ref[R_LN2:R_LN2 + D, :], preferred_element_type=jnp.float32) + ln2b
    out_ref[...] = out.astype(out_ref.dtype)


def pack_params(params):
    """One-time packing: fused QKV (1/sqrt(HD) folded into Q), all weights + diag(ln2_w) into a
    single lane-padded (192, 128) slab, all 1-D vectors into an (8, 128) slab, and the attention
    constants (head selector + cross-batch block bias) into a (128, 128) slab."""
    (wq, bq, wk, bk, wv, bv, wo, bo,
     ln1w, ln1b, w1, b1, w2, b2, ln2w, ln2b) = params
    scale = jnp.float32(1.0 / math.sqrt(HD))

    def padw(w):
        return jnp.pad(w.astype(jnp.float32), ((0, 0), (0, LANES - w.shape[1])))

    def padv(vv):
        return jnp.pad(vv.astype(jnp.float32), (0, LANES - vv.shape[0]))

    wqkv = jnp.concatenate([wq * scale, wk, wv], axis=1)           # (D, 3D)
    bqkv = jnp.concatenate([bq * scale, bk, bv], axis=0)           # (3D,)
    wslab = jnp.concatenate(
        [padw(wqkv), padw(wo), padw(w1), padw(w2), padw(jnp.diag(ln2w))], axis=0)  # (192, 128)

    vec = jnp.stack([padv(bqkv), padv(bo), padv(ln1w), padv(ln1b),
                     padv(b1), padv(b2), padv(ln2b),
                     jnp.zeros((LANES,), jnp.float32)], axis=0)    # (8, 128)

    # Attention constants (precomputed -> no in-kernel iota/select/tile work).
    row_head = np.arange(H * BS)[:, None] // BS
    col_head = np.arange(D)[None, :] // HD
    head_sel = (row_head == col_head).astype(np.float32)           # (H*BS, D)
    rb = np.arange(BS)[:, None] // S
    cb = np.arange(BS)[None, :] // S
    bias_big = np.tile(np.where(rb == cb, 0.0, NEG).astype(np.float32), (H, 1))  # (H*BS, BS)
    consts = np.zeros((2 * H * BS, LANES), np.float32)
    consts[:H * BS, :D] = head_sel
    consts[H * BS:, :BS] = bias_big

    return (wslab.astype(jnp.float32), vec.astype(jnp.float32), jnp.asarray(consts))


@jax.jit
def transformer_block(hidden_states, attention_mask, packed):
    """hidden_states: (B, S, D) f32; attention_mask: (B, 1, 1, S) additive f32 mask or None."""
    wslab, vec, consts = packed
    if attention_mask is None:
        attention_mask = jnp.zeros((B, 1, 1, S), jnp.float32)
    x2d = hidden_states.reshape(BS, D).astype(jnp.float32)
    mask2d = attention_mask.reshape(1, BS).astype(jnp.float32)     # key-position mask, flattened
    out_pad = pl.pallas_call(
        transformer_block_kernel,
        out_shape=jax.ShapeDtypeStruct((BS, LANES), jnp.float32),
        # no grid: whole problem is VMEM-resident, single invocation (see TODOs for scaling)
    )(x2d, mask2d, wslab, vec, consts)
    return out_pad[:, :D].reshape(B, S, D)


# ---------------- pure-JAX reference (sanity check) ----------------
def reference(x, mask, params):
    (wq, bq, wk, bk, wv, bv, wo, bo,
     ln1w, ln1b, w1, b1, w2, b2, ln2w, ln2b) = params

    def ln(v, w, b):
        mu = jnp.mean(v, axis=-1, keepdims=True)
        var = jnp.mean((v - mu) ** 2, axis=-1, keepdims=True)
        return (v - mu) / jnp.sqrt(var + LN_EPS) * w + b

    q = (x @ wq + bq).reshape(B, S, H, HD).transpose(0, 2, 1, 3)
    k = (x @ wk + bk).reshape(B, S, H, HD).transpose(0, 2, 1, 3)
    v = (x @ wv + bv).reshape(B, S, H, HD).transpose(0, 2, 1, 3)
    scores = jnp.einsum("bhqd,bhkd->bhqk", q, k) / math.sqrt(HD) + mask
    probs = jax.nn.softmax(scores, axis=-1)
    ctx = jnp.einsum("bhqk,bhkd->bhqd", probs, v).transpose(0, 2, 1, 3).reshape(B, S, D)
    attn = ctx @ wo + bo
    h1 = ln(attn + x, ln1w, ln1b)
    ff = jax.nn.gelu(h1 @ w1 + b1, approximate=False) @ w2 + b2
    return ln(ff + h1, ln2w, ln2b)


if __name__ == "__main__":
    key = jax.random.PRNGKey(0)
    keys = jax.random.split(key, 16)

    def lin(kw, kb, fan_in, shape_w, shape_b):
        bound = 1.0 / math.sqrt(fan_in)
        w = jax.random.uniform(kw, shape_w, jnp.float32, -bound, bound)
        b = jax.random.uniform(kb, shape_b, jnp.float32, -bound, bound)
        return w, b

    wq, bq = lin(keys[0], keys[1], D, (D, D), (D,))
    wk, bk = lin(keys[2], keys[3], D, (D, D), (D,))
    wv, bv = lin(keys[4], keys[5], D, (D, D), (D,))
    wo, bo = lin(keys[6], keys[7], D, (D, D), (D,))
    ln1_w, ln1_b = jnp.ones((D,), jnp.float32), jnp.zeros((D,), jnp.float32)
    w1, b1 = lin(keys[8], keys[9], D, (D, FF), (FF,))
    w2, b2 = lin(keys[10], keys[11], FF, (FF, D), (D,))
    ln2_w, ln2_b = jnp.ones((D,), jnp.float32), jnp.zeros((D,), jnp.float32)

    params = (wq, bq, wk, bk, wv, bv, wo, bo,
              ln1_w, ln1_b, w1, b1, w2, b2, ln2_w, ln2_b)
    packed = pack_params(params)   # constant-folded once, outside the hot path

    x = jax.random.normal(keys[12], (B, S, D), jnp.float32)
    # additive attention mask [B, 1, 1, S]: mask out the last 2 key positions of batch 1
    mask = jnp.zeros((B, 1, 1, S), jnp.float32)
    mask = mask.at[1, 0, 0, -2:].set(-1e9)

    out = jax.block_until_ready(transformer_block(x, mask, packed))

    ref = reference(x, mask, params)
    # tolerance relaxed slightly for the approx (EUP) softmax reciprocal
    np.testing.assert_allclose(np.asarray(out), np.asarray(ref), rtol=2e-3, atol=2e-3)

    print("KERNEL_OK")
</pallas_src>

<mosaic_0001>
module attributes {stable_mosaic.version = 11 : i64} {
  func.func @transformer_block_kernel(%arg0: memref<16x32xf32, #tpu.memory_space<vmem>>, %arg1: memref<1x16xf32, #tpu.memory_space<vmem>>, %arg2: memref<192x128xf32, #tpu.memory_space<vmem>>, %arg3: memref<8x128xf32, #tpu.memory_space<vmem>>, %arg4: memref<128x128xf32, #tpu.memory_space<vmem>>, %arg5: memref<16x128xf32, #tpu.memory_space<vmem>>) attributes {dimension_semantics = [], scalar_prefetch = 0 : i64, scratch_operands = 0 : i64, tpu.core_type = #tpu.core_type<tc>} {
    %c0 = arith.constant 0 : index
    %c0_0 = arith.constant 0 : index
    %0 = vector.load %arg0[%c0, %c0_0] : memref<16x32xf32, #tpu.memory_space<vmem>>, vector<16x32xf32>
    %c0_1 = arith.constant 0 : index
    %c0_2 = arith.constant 0 : index
    %1 = vector.load %arg3[%c0_1, %c0_2] : memref<8x128xf32, #tpu.memory_space<vmem>>, vector<8x128xf32>
    %2 = vector.extract_strided_slice %1 {offsets = [0, 0], sizes = [1, 128], strides = [1, 1]} : vector<8x128xf32> to vector<1x128xf32>
    %3 = vector.extract_strided_slice %1 {offsets = [1, 0], sizes = [1, 32], strides = [1, 1]} : vector<8x128xf32> to vector<1x32xf32>
    %4 = vector.extract_strided_slice %1 {offsets = [2, 0], sizes = [1, 32], strides = [1, 1]} : vector<8x128xf32> to vector<1x32xf32>
    %5 = vector.extract_strided_slice %1 {offsets = [3, 0], sizes = [1, 32], strides = [1, 1]} : vector<8x128xf32> to vector<1x32xf32>
    %6 = vector.extract_strided_slice %1 {offsets = [4, 0], sizes = [1, 128], strides = [1, 1]} : vector<8x128xf32> to vector<1x128xf32>
    %7 = vector.extract_strided_slice %1 {offsets = [5, 0], sizes = [1, 32], strides = [1, 1]} : vector<8x128xf32> to vector<1x32xf32>
    %8 = vector.extract_strided_slice %1 {offsets = [6, 0], sizes = [1, 128], strides = [1, 1]} : vector<8x128xf32> to vector<1x128xf32>
    %c0_3 = arith.constant 0 : index
    %c0_4 = arith.constant 0 : index
    %9 = vector.load %arg4[%c0_3, %c0_4] : memref<128x128xf32, #tpu.memory_space<vmem>>, vector<64x32xf32>
    %c64 = arith.constant 64 : index
    %c0_5 = arith.constant 0 : index
    %10 = vector.load %arg4[%c64, %c0_5] : memref<128x128xf32, #tpu.memory_space<vmem>>, vector<64x16xf32>
    %c0_6 = arith.constant 0 : index
    %c0_7 = arith.constant 0 : index
    %11 = vector.load %arg2[%c0_6, %c0_7] : memref<192x128xf32, #tpu.memory_space<vmem>>, vector<32x128xf32>
    %cst = arith.constant dense<0.000000e+00> : vector<16x128xf32>
    %12 = tpu.matmul %0, %11, %cst {dimension_numbers = #tpu.dot_dimension_numbers<[1], [0], [0], [1], [0, 0, 1, 1], [], []>} : vector<16x32xf32>, vector<32x128xf32>, vector<16x128xf32> -> vector<16x128xf32>
    %13 = vector.broadcast %2 : vector<1x128xf32> to vector<16x128xf32>
    %14 = arith.addf %12, %13 : vector<16x128xf32>
    %15 = vector.extract_strided_slice %14 {offsets = [0, 0], sizes = [16, 32], strides = [1, 1]} : vector<16x128xf32> to vector<16x32xf32>
    %16 = vector.extract_strided_slice %14 {offsets = [0, 32], sizes = [16, 32], strides = [1, 1]} : vector<16x128xf32> to vector<16x32xf32>
    %17 = vector.extract_strided_slice %14 {offsets = [0, 64], sizes = [16, 32], strides = [1, 1]} : vector<16x128xf32> to vector<16x32xf32>
    %18 = vector.shape_cast %15 : vector<16x32xf32> to vector<1x16x32xf32>
    %19 = vector.broadcast %18 : vector<1x16x32xf32> to vector<4x16x32xf32>
    %20 = vector.shape_cast %19 : vector<4x16x32xf32> to vector<64x32xf32>
    %21 = arith.mulf %20, %9 : vector<64x32xf32>
    %22 = tpu.transpose %16, [1, 0] : vector<16x32xf32> -> vector<32x16xf32>
    %cst_8 = arith.constant dense<0.000000e+00> : vector<64x16xf32>
    %23 = tpu.matmul %21, %22, %cst_8 {dimension_numbers = #tpu.dot_dimension_numbers<[1], [0], [0], [1], [0, 0, 1, 1], [], []>} : vector<64x32xf32>, vector<32x16xf32>, vector<64x16xf32> -> vector<64x16xf32>
    %24 = arith.addf %23, %10 : vector<64x16xf32>
    %c0_9 = arith.constant 0 : index
    %c0_10 = arith.constant 0 : index
    %25 = vector.load %arg1[%c0_9, %c0_10] : memref<1x16xf32, #tpu.memory_space<vmem>>, vector<1x16xf32>
    %26 = vector.broadcast %25 : vector<1x16xf32> to vector<64x16xf32>
    %27 = arith.addf %24, %26 : vector<64x16xf32>
    %cst_11 = arith.constant dense<0xFF800000> : vector<64xf32>
    %28 = vector.multi_reduction <maximumf>, %27, %cst_11 [1] : vector<64x16xf32> to vector<64xf32>
    %29 = vector.shape_cast %28 : vector<64xf32> to vector<64x1xf32>
    %30 = vector.broadcast %29 : vector<64x1xf32> to vector<64x16xf32>
    %31 = arith.subf %27, %30 : vector<64x16xf32>
    %32 = math.exp %31 : vector<64x16xf32>
    %cst_12 = arith.constant dense<0.000000e+00> : vector<64xf32>
    %33 = vector.multi_reduction <add>, %32, %cst_12 [1] : vector<64x16xf32> to vector<64xf32>
    %34 = vector.shape_cast %33 : vector<64xf32> to vector<64x1xf32>
    %35 = tpu.reciprocal %34 {approx = true} : vector<64x1xf32> -> vector<64x1xf32>
    %36 = vector.broadcast %35 : vector<64x1xf32> to vector<64x16xf32>
    %37 = arith.mulf %32, %36 : vector<64x16xf32>
    %cst_13 = arith.constant dense<0.000000e+00> : vector<64x32xf32>
    %38 = tpu.matmul %37, %17, %cst_13 {dimension_numbers = #tpu.dot_dimension_numbers<[1], [0], [0], [1], [0, 0, 1, 1], [], []>} : vector<64x16xf32>, vector<16x32xf32>, vector<64x32xf32> -> vector<64x32xf32>
    %39 = arith.mulf %38, %9 : vector<64x32xf32>
    %40 = vector.extract_strided_slice %39 {offsets = [0, 0], sizes = [16, 32], strides = [1, 1]} : vector<64x32xf32> to vector<16x32xf32>
    %41 = vector.extract_strided_slice %39 {offsets = [16, 0], sizes = [16, 32], strides = [1, 1]} : vector<64x32xf32> to vector<16x32xf32>
    %42 = arith.addf %40, %41 : vector<16x32xf32>
    %43 = vector.extract_strided_slice %39 {offsets = [32, 0], sizes = [16, 32], strides = [1, 1]} : vector<64x32xf32> to vector<16x32xf32>
    %44 = arith.addf %42, %43 : vector<16x32xf32>
    %45 = vector.extract_strided_slice %39 {offsets = [48, 0], sizes = [16, 32], strides = [1, 1]} : vector<64x32xf32> to vector<16x32xf32>
    %46 = arith.addf %44, %45 : vector<16x32xf32>
    %c32 = arith.constant 32 : index
    %c0_14 = arith.constant 0 : index
    %47 = vector.load %arg2[%c32, %c0_14] : memref<192x128xf32, #tpu.memory_space<vmem>>, vector<32x128xf32>
    %cst_15 = arith.constant dense<0.000000e+00> : vector<16x128xf32>
    %48 = tpu.matmul %46, %47, %cst_15 {dimension_numbers = #tpu.dot_dimension_numbers<[1], [0], [0], [1], [0, 0, 1, 1], [], []>} : vector<16x32xf32>, vector<32x128xf32>, vector<16x128xf32> -> vector<16x128xf32>
    %49 = vector.extract_strided_slice %48 {offsets = [0, 0], sizes = [16, 32], strides = [1, 1]} : vector<16x128xf32> to vector<16x32xf32>
    %50 = vector.broadcast %3 : vector<1x32xf32> to vector<16x32xf32>
    %51 = arith.addf %49, %50 : vector<16x32xf32>
    %52 = arith.addf %51, %0 : vector<16x32xf32>
    %cst_16 = arith.constant dense<0.000000e+00> : vector<16xf32>
    %53 = vector.multi_reduction <add>, %52, %cst_16 [1] : vector<16x32xf32> to vector<16xf32>
    %54 = vector.shape_cast %53 : vector<16xf32> to vector<16x1xf32>
    %cst_17 = arith.constant 3.200000e+01 : f32
    %55 = vector.broadcast %cst_17 : f32 to vector<16x1xf32>
    %56 = arith.divf %54, %55 : vector<16x1xf32>
    %57 = vector.broadcast %56 : vector<16x1xf32> to vector<16x32xf32>
    %58 = arith.subf %52, %57 : vector<16x32xf32>
    %59 = arith.mulf %58, %58 : vector<16x32xf32>
    %cst_18 = arith.constant dense<0.000000e+00> : vector<16xf32>
    %60 = vector.multi_reduction <add>, %59, %cst_18 [1] : vector<16x32xf32> to vector<16xf32>
    %61 = vector.shape_cast %60 : vector<16xf32> to vector<16x1xf32>
    %cst_19 = arith.constant 3.200000e+01 : f32
    %62 = vector.broadcast %cst_19 : f32 to vector<16x1xf32>
    %63 = arith.divf %61, %62 : vector<16x1xf32>
    %64 = vector.broadcast %56 : vector<16x1xf32> to vector<16x32xf32>
    %65 = arith.subf %52, %64 : vector<16x32xf32>
    %cst_20 = arith.constant 9.99999996E-13 : f32
    %66 = vector.broadcast %cst_20 : f32 to vector<16x1xf32>
    %67 = arith.addf %63, %66 : vector<16x1xf32>
    %68 = math.rsqrt %67 : vector<16x1xf32>
    %69 = vector.broadcast %68 : vector<16x1xf32> to vector<16x32xf32>
    %70 = arith.mulf %65, %69 : vector<16x32xf32>
    %71 = vector.broadcast %4 : vector<1x32xf32> to vector<16x32xf32>
    %72 = arith.mulf %70, %71 : vector<16x32xf32>
    %73 = vector.broadcast %5 : vector<1x32xf32> to vector<16x32xf32>
    %74 = arith.addf %72, %73 : vector<16x32xf32>
    %c64_21 = arith.constant 64 : index
    %c0_22 = arith.constant 0 : index
    %75 = vector.load %arg2[%c64_21, %c0_22] : memref<192x128xf32, #tpu.memory_space<vmem>>, vector<32x128xf32>
    %cst_23 = arith.constant dense<0.000000e+00> : vector<16x128xf32>
    %76 = tpu.matmul %74, %75, %cst_23 {dimension_numbers = #tpu.dot_dimension_numbers<[1], [0], [0], [1], [0, 0, 1, 1], [], []>} : vector<16x32xf32>, vector<32x128xf32>, vector<16x128xf32> -> vector<16x128xf32>
    %77 = vector.broadcast %6 : vector<1x128xf32> to vector<16x128xf32>
    %78 = arith.addf %76, %77 : vector<16x128xf32>
    %cst_24 = arith.constant 5.000000e-01 : f32
    %79 = vector.broadcast %cst_24 : f32 to vector<16x128xf32>
    %80 = arith.mulf %79, %78 : vector<16x128xf32>
    %cst_25 = arith.constant 0.707106769 : f32
    %81 = vector.broadcast %cst_25 : f32 to vector<16x128xf32>
    %82 = arith.mulf %78, %81 : vector<16x128xf32>
    %83 = math.erf %82 : vector<16x128xf32>
    %cst_26 = arith.constant 1.000000e+00 : f32
    %84 = vector.broadcast %cst_26 : f32 to vector<16x128xf32>
    %85 = arith.addf %84, %83 : vector<16x128xf32>
    %86 = arith.mulf %80, %85 : vector<16x128xf32>
    %87 = vector.extract_strided_slice %86 {offsets = [0, 0], sizes = [16, 64], strides = [1, 1]} : vector<16x128xf32> to vector<16x64xf32>
    %c96 = arith.constant 96 : index
    %c0_27 = arith.constant 0 : index
    %88 = vector.load %arg2[%c96, %c0_27] : memref<192x128xf32, #tpu.memory_space<vmem>>, vector<64x128xf32>
    %cst_28 = arith.constant dense<0.000000e+00> : vector<16x128xf32>
    %89 = tpu.matmul %87, %88, %cst_28 {dimension_numbers = #tpu.dot_dimension_numbers<[1], [0], [0], [1], [0, 0, 1, 1], [], []>} : vector<16x64xf32>, vector<64x128xf32>, vector<16x128xf32> -> vector<16x128xf32>
    %90 = vector.extract_strided_slice %89 {offsets = [0, 0], sizes = [16, 32], strides = [1, 1]} : vector<16x128xf32> to vector<16x32xf32>
    %91 = vector.broadcast %7 : vector<1x32xf32> to vector<16x32xf32>
    %92 = arith.addf %90, %91 : vector<16x32xf32>
    %93 = arith.addf %92, %74 : vector<16x32xf32>
    %cst_29 = arith.constant dense<0.000000e+00> : vector<16xf32>
    %94 = vector.multi_reduction <add>, %93, %cst_29 [1] : vector<16x32xf32> to vector<16xf32>
    %95 = vector.shape_cast %94 : vector<16xf32> to vector<16x1xf32>
    %cst_30 = arith.constant 3.200000e+01 : f32
    %96 = vector.broadcast %cst_30 : f32 to vector<16x1xf32>
    %97 = arith.divf %95, %96 : vector<16x1xf32>
    %98 = vector.broadcast %97 : vector<16x1xf32> to vector<16x32xf32>
    %99 = arith.subf %93, %98 : vector<16x32xf32>
    %100 = arith.mulf %99, %99 : vector<16x32xf32>
    %cst_31 = arith.constant dense<0.000000e+00> : vector<16xf32>
    %101 = vector.multi_reduction <add>, %100, %cst_31 [1] : vector<16x32xf32> to vector<16xf32>
    %102 = vector.shape_cast %101 : vector<16xf32> to vector<16x1xf32>
    %cst_32 = arith.constant 3.200000e+01 : f32
    %103 = vector.broadcast %cst_32 : f32 to vector<16x1xf32>
    %104 = arith.divf %102, %103 : vector<16x1xf32>
    %105 = vector.broadcast %97 : vector<16x1xf32> to vector<16x32xf32>
    %106 = arith.subf %93, %105 : vector<16x32xf32>
    %cst_33 = arith.constant 9.99999996E-13 : f32
    %107 = vector.broadcast %cst_33 : f32 to vector<16x1xf32>
    %108 = arith.addf %104, %107 : vector<16x1xf32>
    %109 = math.rsqrt %108 : vector<16x1xf32>
    %110 = vector.broadcast %109 : vector<16x1xf32> to vector<16x32xf32>
    %111 = arith.mulf %106, %110 : vector<16x32xf32>
    %c160 = arith.constant 160 : index
    %c0_34 = arith.constant 0 : index
    %112 = vector.load %arg2[%c160, %c0_34] : memref<192x128xf32, #tpu.memory_space<vmem>>, vector<32x128xf32>
    %cst_35 = arith.constant dense<0.000000e+00> : vector<16x128xf32>
    %113 = tpu.matmul %111, %112, %cst_35 {dimension_numbers = #tpu.dot_dimension_numbers<[1], [0], [0], [1], [0, 0, 1, 1], [], []>} : vector<16x32xf32>, vector<32x128xf32>, vector<16x128xf32> -> vector<16x128xf32>
    %114 = vector.broadcast %8 : vector<1x128xf32> to vector<16x128xf32>
    %115 = arith.addf %113, %114 : vector<16x128xf32>
    %c0_36 = arith.constant 0 : index
    %c0_37 = arith.constant 0 : index
    %116 = vector.load %arg5[%c0_36, %c0_37] : memref<16x128xf32, #tpu.memory_space<vmem>>, vector<16x128xf32>
    tpu.vector_store %arg5[%c0_36, %c0_37], %115 {strides = array<i32>} : memref<16x128xf32, #tpu.memory_space<vmem>>, vector<16x128xf32>,
    return
  }
}

</mosaic_0001>

<llo_original>
// kernel: transformer_block.1
$region0: #{transformer_block.1}
  #allocation0 [shape = 'u32[]', space=smem, size = 0x4, offset = 0x4, fixed_abs, tag = 'smem constant byte address 0x4 - core index']
  #allocation1 [shape = 'u32[144,128]{1,0:T(1,128)}', space=vmem, size = 0x12000, scoped, tag = 'internal scratch']
  %s0 = inlined_call_operand.hbm [shape: f32[16,32], index: 0, kind: input, shape index: {}]
  %s1 = inlined_call_operand.vmem [shape: f32[1,16], index: 1, kind: input, shape index: {}]
  %s2 = inlined_call_operand.hbm [shape: f32[192,128], index: 2, kind: input, shape index: {}]
  %s3 = inlined_call_operand.vmem [shape: f32[8,128], index: 3, kind: input, shape index: {}]
  %s4 = inlined_call_operand.hbm [shape: f32[128,128], index: 4, kind: input, shape index: {}]
  %s5 = inlined_call_operand.vmem [shape: f32[16,128], index: 5, kind: output, shape index: {}]
  %s6 = sld [smem:[#allocation0]]
  $region42: #{transformer_block.1} parent=0
    _
  %s8 = ssub.s32 1, %s6
  %s9 = scalar_select 0, %s8, %s6
  $region1: #{transformer_block.1} parent=0
    #allocation2 [shape = 'u8[8192]{0}', space=vmem, size = 0x2000, scoped, tag = 'input window, operand 0, single buffered']
    #allocation3 [shape = 's32[1]{0}', space=sflag, size = 0x4, scoped, tag = 'scoped memory for transformer_block.1']
    #allocation4 [shape = 'u8[98304]{0}', space=vmem, size = 0x18000, scoped, tag = 'input window, operand 2, single buffered']
    #allocation5 [shape = 's32[1]{0}', space=sflag, size = 0x4, scoped, tag = 'scoped memory for transformer_block.1']
    #allocation6 [shape = 'u8[65536]{0}', space=vmem, size = 0x10000, scoped, tag = 'input window, operand 4, single buffered']
    %10 = vsyncpa [#allocation3], 0
    %11 = vsyncpa [#allocation5], 0
    // Predicated region
    $region2: #{transformer_block.1} parent=1 // pred_check
      _
    $region3: #{transformer_block.1} parent=1 // pred_check_branch
      %13 = sbr.rel (0) target = $region5
    $region4: #{transformer_block.1} parent=1 // pred_region
      %s15 = ssub.s32 256, 256
      %16 = vsyncadd [#allocation3], %s15
      %s17 = sshll.u32 [#allocation2], 4
      %s18 = int_to_ptr.vmem [resolvable:$true] %s17
      %23 = dma.hbm_to_vmem [thread:$0]  %s0, 256, %s18, [#allocation3], 128, 128, 8
    $region5: #{transformer_block.1} parent=1 // pred_fallthru
      _
    // Predicated region
    $region6: #{transformer_block.1} parent=1 // pred_check
      _
    $region7: #{transformer_block.1} parent=1 // pred_check_branch
      %25 = sbr.rel (0) target = $region9
    $region8: #{transformer_block.1} parent=1 // pred_region
      _
    $region9: #{transformer_block.1} parent=1 // pred_fallthru
      _
    // Predicated region
    $region10: #{transformer_block.1} parent=1 // pred_check
      _
    $region11: #{transformer_block.1} parent=1 // pred_check_branch
      %27 = sbr.rel (0) target = $region13
    $region12: #{transformer_block.1} parent=1 // pred_region
      %s29 = ssub.s32 3072, 3072
      %30 = vsyncadd [#allocation5], %s29
      %s31 = sshll.u32 [#allocation4], 4
      %s32 = int_to_ptr.vmem [resolvable:$true] %s31
      %37 = dma.hbm_to_vmem [thread:$0]  %s2, 3072, %s32, [#allocation5], 128, 128, 8
    $region13: #{transformer_block.1} parent=1 // pred_fallthru
      _
    // Predicated region
    $region14: #{transformer_block.1} parent=1 // pred_check
      _
    $region15: #{transformer_block.1} parent=1 // pred_check_branch
      %39 = sbr.rel (0) target = $region17
    $region16: #{transformer_block.1} parent=1 // pred_region
      _
    $region17: #{transformer_block.1} parent=1 // pred_fallthru
      _
    // Predicated region
    $region18: #{transformer_block.1} parent=1 // pred_check
      _
    $region19: #{transformer_block.1} parent=1 // pred_check_branch
      %41 = sbr.rel (0) target = $region21
    $region20: #{transformer_block.1} parent=1 // pred_region
      %s43 = ssub.s32 2048, 2048
      %44 = vsyncadd [#allocation5], %s43
      %s45 = sshll.u32 [#allocation6], 4
      %s46 = int_to_ptr.vmem [resolvable:$true] %s45
      %51 = dma.hbm_to_vmem [thread:$0]  %s4, 2048, %s46, [#allocation5], 128, 128, 8
    $region21: #{transformer_block.1} parent=1 // pred_fallthru
      _
    // Predicated region
    $region22: #{transformer_block.1} parent=1 // pred_check
      _
    $region23: #{transformer_block.1} parent=1 // pred_check_branch
      %53 = sbr.rel (0) target = $region25
    $region24: #{transformer_block.1} parent=1 // pred_region
      %54 = dma.done [#allocation3], 256
    $region25: #{transformer_block.1} parent=1 // pred_fallthru
      _
    // Predicated region
    $region26: #{transformer_block.1} parent=1 // pred_check
      _
    $region27: #{transformer_block.1} parent=1 // pred_check_branch
      %56 = sbr.rel (0) target = $region29
    $region28: #{transformer_block.1} parent=1 // pred_region
      %57 = dma.done [#allocation5], 3072
    $region29: #{transformer_block.1} parent=1 // pred_fallthru
      _
    // Predicated region
    $region30: #{transformer_block.1} parent=1 // pred_check
      _
    $region31: #{transformer_block.1} parent=1 // pred_check_branch
      %59 = sbr.rel (0) target = $region33
    $region32: #{transformer_block.1} parent=1 // pred_region
      %60 = dma.done [#allocation5], 2048
    $region33: #{transformer_block.1} parent=1 // pred_fallthru
      _
    %v61 = vld [vmem:[#allocation2] sm:$0xff]
    %v62 = vld [vmem:[#allocation2 + $0x8] sm:$0xff]
    %v63 = vld [vmem:[%s3] sm:$0xff]
    %v64 = vld [vmem:[#allocation6] sm:$0xff]
    %v65 = vld [vmem:[#allocation6 + $0x8] sm:$0xff]
    %v66 = vld [vmem:[#allocation6 + $0x10] sm:$0xff]
    %v67 = vld [vmem:[#allocation6 + $0x18] sm:$0xff]
    %v68 = vld [vmem:[#allocation6 + $0x20] sm:$0xff]
    %v69 = vld [vmem:[#allocation6 + $0x28] sm:$0xff]
    %v70 = vld [vmem:[#allocation6 + $0x30] sm:$0xff]
    %v71 = vld [vmem:[#allocation6 + $0x38] sm:$0xff]
    %v72 = vld [vmem:[#allocation6 + $0x40] sm:$0xff]
    %v73 = vld [vmem:[#allocation6 + $0x48] sm:$0xff]
    %v74 = vld [vmem:[#allocation6 + $0x50] sm:$0xff]
    %v75 = vld [vmem:[#allocation6 + $0x58] sm:$0xff]
    %v76 = vld [vmem:[#allocation6 + $0x60] sm:$0xff]
    %v77 = vld [vmem:[#allocation6 + $0x68] sm:$0xff]
    %v78 = vld [vmem:[#allocation6 + $0x70] sm:$0xff]
    %v79 = vld [vmem:[#allocation6 + $0x78] sm:$0xff]
    %v80 = vld [vmem:[#allocation4] sm:$0xff]
    %v81 = vld [vmem:[#allocation4 + $0x8] sm:$0xff]
    %v82 = vld [vmem:[#allocation4 + $0x10] sm:$0xff]
    %v83 = vld [vmem:[#allocation4 + $0x18] sm:$0xff]
    %v84 = vlaneseq
    %v85 = vshrl.u32 %v84, 7
    %v86 = vsub.s32 0, %v85
    %v87 = vrot.slane %v63, %v86
    %vm88 = vcmask 261120
    %v90 = vsel %vm88, %v61, 0
    %v93 = vsel %vm88, %v62, 0
    %95 = vmatprep.subr.mxu0 0.0
    %96 = vmatpush1.msra.mxu0 0.0
    %97 = vmatprep.subr.mxu0 0.0
    %98 = vmatpush1.msra.mxu0 0.0
    %99 = vmatprep.subr.mxu0 0.0
    %100 = vmatpush1.msra.mxu0 0.0
    %101 = vmatprep.subr.mxu0 0.0
    %102 = vmatpush1.msra.mxu0 0.0
    %103 = vmatprep.subr.mxu0 0.0
    %104 = vmatpush1.msra.mxu0 0.0
    %105 = vmatprep.subr.mxu0 0.0
    %106 = vmatpush1.msra.mxu0 0.0
    %107 = vmatprep.subr.mxu0 0.0
    %108 = vmatpush1.msra.mxu0 0.0
    %109 = vmatprep.subr.mxu0 0.0
    %110 = vmatpush1.msra.mxu0 0.0
    %111 = vmatprep.subr.mxu0 0.0
    %112 = vmatpush1.msra.mxu0 0.0
    %113 = vmatprep.subr.mxu0 0.0
    %114 = vmatpush1.msra.mxu0 0.0
    %115 = vmatprep.subr.mxu0 0.0
    %116 = vmatpush1.msra.mxu0 0.0
    %117 = vmatprep.subr.mxu0 0.0
    %118 = vmatpush1.msra.mxu0 0.0
    %119 = vmatprep.subr.mxu0 0.0
    %120 = vmatpush1.msra.mxu0 %v83
    %121 = vmatprep.subr.mxu0 0.0
    %122 = vmatpush1.msra.mxu0 %v82
    %123 = vmatprep.subr.mxu0 0.0
    %124 = vmatpush1.msra.mxu0 %v81
    %125 = vmatprep.subr.mxu0 0.0
    %126 = vmatpush1.msra.mxu0 %v80
    %127 = vmatprep.subr.mxu0 0.0
    %128 = vmatpush2.msra.mxu0 0.0
    %129 = vmatprep.subr.mxu0 0.0
    %130 = vmatpush2.msra.mxu0 0.0
    %131 = vmatprep.subr.mxu0 0.0
    %132 = vmatpush2.msra.mxu0 0.0
    %133 = vmatprep.subr.mxu0 0.0
    %134 = vmatpush2.msra.mxu0 0.0
    %135 = vmatprep.subr.mxu0 0.0
    %136 = vmatpush2.msra.mxu0 0.0
    %137 = vmatprep.subr.mxu0 0.0
    %138 = vmatpush2.msra.mxu0 0.0
    %139 = vmatprep.subr.mxu0 0.0
    %140 = vmatpush2.msra.mxu0 0.0
    %141 = vmatprep.subr.mxu0 0.0
    %142 = vmatpush2.msra.mxu0 0.0
    %143 = vmatprep.subr.mxu0 0.0
    %144 = vmatpush2.msra.mxu0 0.0
    %145 = vmatprep.subr.mxu0 0.0
    %146 = vmatpush2.msra.mxu0 0.0
    %147 = vmatprep.subr.mxu0 0.0
    %148 = vmatpush2.msra.mxu0 0.0
    %149 = vmatprep.subr.mxu0 0.0
    %150 = vmatpush2.msra.mxu0 0.0
    %151 = vmatprep.subr.mxu0 0.0
    %152 = vmatpush2.msra.mxu0 0.0
    %153 = vmatprep.subr.mxu0 0.0
    %154 = vmatpush2.msra.mxu0 0.0
    %155 = vmatprep.subr.mxu0 0.0
    %156 = vmatpush2.msra.mxu0 0.0
    %157 = vmatprep.subr.mxu0 0.0
    %158 = vmatpush2.msra.mxu0 0.0
    %159 = vmatprep.mubr.f32.mxu0 0.0
    %160 = vmatmul.mubr.f32.gmra.mxu0 %v90
    %v161 = vpop.f32.mrf.mxu0
    %v162 = vadd.f32 %v87, %v161
    %v163 = vpop.f32.mrf.mxu0
    %164 = vmatprep.mubr.f32.mxu0 0.0
    %165 = vmatmul.mubr.f32.gmra.mxu0 %v93
    %v166 = vpop.f32.mrf.mxu0
    %v167 = vadd.f32 %v87, %v166
    %v168 = vpop.f32.mrf.mxu0
    %169 = vdwg.mxu0
    %v170 = vmul.f32 %v162, %v64
    %v171 = vmul.f32 %v167, %v65
    %v172 = vmul.f32 %v162, %v66
    %v173 = vmul.f32 %v167, %v67
    %v174 = vmul.f32 %v162, %v68
    %v175 = vmul.f32 %v167, %v69
    %v176 = vmul.f32 %v162, %v70
    %v177 = vmul.f32 %v167, %v71
    %180 = vrot.lane.b32.xlu0 %v162, 96
    %v181 = vpop.permute.xlu0 %180
    %182 = vrot.lane.b32.xlu0 %v167, 96
    %v183 = vpop.permute.xlu0 %182
    %v185 = vsel %vm88, %v170, 0
    %v188 = vsel %vm88, %v171, 0
    %v191 = vsel %vm88, %v172, 0
    %v194 = vsel %vm88, %v173, 0
    %v197 = vsel %vm88, %v174, 0
    %v200 = vsel %vm88, %v175, 0
    %v203 = vsel %vm88, %v176, 0
    %v206 = vsel %vm88, %v177, 0
    %v208 = vsel %vm88, %v181, 0
    %v210 = vsel %vm88, %v183, 0
    %212 = vmatprep.subr.mxu0 0.0
    %213 = vmatpush1.xpose.msra.mxu0 0.0
    %214 = vmatprep.subr.mxu0 0.0
    %215 = vmatpush1.xpose.msra.mxu0 0.0
    %216 = vmatprep.subr.mxu0 0.0
    %217 = vmatpush1.xpose.msra.mxu0 0.0
    %218 = vmatprep.subr.mxu0 0.0
    %219 = vmatpush1.xpose.msra.mxu0 0.0
    %220 = vmatprep.subr.mxu0 0.0
    %221 = vmatpush1.xpose.msra.mxu0 0.0
    %222 = vmatprep.subr.mxu0 0.0
    %223 = vmatpush1.xpose.msra.mxu0 0.0
    %224 = vmatprep.subr.mxu0 0.0
    %225 = vmatpush1.xpose.msra.mxu0 0.0
    %226 = vmatprep.subr.mxu0 0.0
    %227 = vmatpush1.xpose.msra.mxu0 0.0
    %228 = vmatprep.subr.mxu0 0.0
    %229 = vmatpush1.xpose.msra.mxu0 0.0
    %230 = vmatprep.subr.mxu0 0.0
    %231 = vmatpush1.xpose.msra.mxu0 0.0
    %232 = vmatprep.subr.mxu0 0.0
    %233 = vmatpush1.xpose.msra.mxu0 0.0
    %234 = vmatprep.subr.mxu0 0.0
    %235 = vmatpush1.xpose.msra.mxu0 0.0
    %236 = vmatprep.subr.mxu0 0.0
    %237 = vmatpush1.xpose.msra.mxu0 0.0
    %238 = vmatprep.subr.mxu0 0.0
    %239 = vmatpush1.xpose.msra.mxu0 0.0
    %240 = vmatprep.subr.mxu0 0.0
    %241 = vmatpush1.xpose.msra.mxu0 %v210
    %242 = vmatprep.subr.mxu0 0.0
    %243 = vmatpush1.xpose.msra.mxu0 %v208
    %244 = vmatprep.subr.mxu0 0.0
    %245 = vmatpush2.xpose.msra.mxu0 0.0
    %246 = vmatprep.subr.mxu0 0.0
    %247 = vmatpush2.xpose.msra.mxu0 0.0
    %248 = vmatprep.subr.mxu0 0.0
    %249 = vmatpush2.xpose.msra.mxu0 0.0
    %250 = vmatprep.subr.mxu0 0.0
    %251 = vmatpush2.xpose.msra.mxu0 0.0
    %252 = vmatprep.subr.mxu0 0.0
    %253 = vmatpush2.xpose.msra.mxu0 0.0
    %254 = vmatprep.subr.mxu0 0.0
    %255 = vmatpush2.xpose.msra.mxu0 0.0
    %256 = vmatprep.subr.mxu0 0.0
    %257 = vmatpush2.xpose.msra.mxu0 0.0
    %258 = vmatprep.subr.mxu0 0.0
    %259 = vmatpush2.xpose.msra.mxu0 0.0
    %260 = vmatprep.subr.mxu0 0.0
    %261 = vmatpush2.xpose.msra.mxu0 0.0
    %262 = vmatprep.subr.mxu0 0.0
    %263 = vmatpush2.xpose.msra.mxu0 0.0
    %264 = vmatprep.subr.mxu0 0.0
    %265 = vmatpush2.xpose.msra.mxu0 0.0
    %266 = vmatprep.subr.mxu0 0.0
    %267 = vmatpush2.xpose.msra.mxu0 0.0
    %268 = vmatprep.subr.mxu0 0.0
    %269 = vmatpush2.xpose.msra.mxu0 0.0
    %270 = vmatprep.subr.mxu0 0.0
    %271 = vmatpush2.xpose.msra.mxu0 0.0
    %272 = vmatprep.subr.mxu0 0.0
    %273 = vmatpush2.xpose.msra.mxu0 0.0
    %274 = vmatprep.subr.mxu0 0.0
    %275 = vmatpush2.xpose.msra.mxu0 0.0
    %276 = vmatprep.mubr.f32.mxu0 0.0
    %277 = vmatmul.mubr.f32.gmra.mxu0 %v185
    %v278 = vpop.f32.mrf.mxu0
    %v279 = vadd.f32 %v72, %v278
    %v280 = vpop.f32.mrf.mxu0
    %281 = vmatprep.mubr.f32.mxu0 0.0
    %282 = vmatmul.mubr.f32.gmra.mxu0 %v188
    %v283 = vpop.f32.mrf.mxu0
    %v284 = vadd.f32 %v73, %v283
    %v285 = vpop.f32.mrf.mxu0
    %286 = vmatprep.mubr.f32.mxu0 0.0
    %287 = vmatmul.mubr.f32.gmra.mxu0 %v191
    %v288 = vpop.f32.mrf.mxu0
    %v289 = vadd.f32 %v74, %v288
    %v290 = vpop.f32.mrf.mxu0
    %291 = vmatprep.mubr.f32.mxu0 0.0
    %292 = vmatmul.mubr.f32.gmra.mxu0 %v194
    %v293 = vpop.f32.mrf.mxu0
    %v294 = vadd.f32 %v75, %v293
    %v295 = vpop.f32.mrf.mxu0
    %296 = vmatprep.mubr.f32.mxu0 0.0
    %297 = vmatmul.mubr.f32.gmra.mxu0 %v197
    %v298 = vpop.f32.mrf.mxu0
    %v299 = vadd.f32 %v76, %v298
    %v300 = vpop.f32.mrf.mxu0
    %301 = vmatprep.mubr.f32.mxu0 0.0
    %302 = vmatmul.mubr.f32.gmra.mxu0 %v200
    %v303 = vpop.f32.mrf.mxu0
    %v304 = vadd.f32 %v77, %v303
    %v305 = vpop.f32.mrf.mxu0
    %306 = vmatprep.mubr.f32.mxu0 0.0
    %307 = vmatmul.mubr.f32.gmra.mxu0 %v203
    %v308 = vpop.f32.mrf.mxu0
    %v309 = vadd.f32 %v78, %v308
    %v310 = vpop.f32.mrf.mxu0
    %311 = vmatprep.mubr.f32.mxu0 0.0
    %312 = vmatmul.mubr.f32.gmra.mxu0 %v206
    %v313 = vpop.f32.mrf.mxu0
    %v314 = vadd.f32 %v79, %v313
    %v315 = vpop.f32.mrf.mxu0
    %316 = vdwg.mxu0
    %v317 = vld [vmem:[%s1] sm:$0x1]
    %v319 = vlaneseq
    %v320 = vshrl.u32 %v319, 7
    %v321 = vsub.s32 0, %v320
    %v322 = vrot.slane %v317, %v321
    %v324 = vadd.f32 %v279, %v322
    %v325 = vadd.f32 %v284, %v322
    %v326 = vadd.f32 %v289, %v322
    %v327 = vadd.f32 %v294, %v322
    %v328 = vadd.f32 %v299, %v322
    %v329 = vadd.f32 %v304, %v322
    %v330 = vadd.f32 %v309, %v322
    %v331 = vadd.f32 %v314, %v322
    %vm332 = vcmask 130048
    %v333 = vsel %vm332, %v324, -inf
    %334 = vmax.xlane.f32.xlu0 %v333
    %v335 = vpop.xlane.xlu0 %334
    %v336 = vsel %vm332, %v325, -inf
    %337 = vmax.xlane.f32.xlu0 %v336
    %v338 = vpop.xlane.xlu0 %337
    %v339 = vsel %vm332, %v326, -inf
    %340 = vmax.xlane.f32.xlu0 %v339
    %v341 = vpop.xlane.xlu0 %340
    %v342 = vsel %vm332, %v327, -inf
    %343 = vmax.xlane.f32.xlu0 %v342
    %v344 = vpop.xlane.xlu0 %343
    %v345 = vsel %vm332, %v328, -inf
    %346 = vmax.xlane.f32.xlu0 %v345
    %v347 = vpop.xlane.xlu0 %346
    %v348 = vsel %vm332, %v329, -inf
    %349 = vmax.xlane.f32.xlu0 %v348
    %v350 = vpop.xlane.xlu0 %349
    %v351 = vsel %vm332, %v330, -inf
    %352 = vmax.xlane.f32.xlu0 %v351
    %v353 = vpop.xlane.xlu0 %352
    %v354 = vsel %vm332, %v331, -inf
    %355 = vmax.xlane.f32.xlu0 %v354
    %v356 = vpop.xlane.xlu0 %355
    %v357 = vsub.f32 %v324, %v335
    %v358 = vsub.f32 %v325, %v338
    %v359 = vsub.f32 %v326, %v341
    %v360 = vsub.f32 %v327, %v344
    %v361 = vsub.f32 %v328, %v347
    %v362 = vsub.f32 %v329, %v350
    %v363 = vsub.f32 %v330, %v353
    %v364 = vsub.f32 %v331, %v356
    %v365 = vmul.f32 %v357, 1.442695
    %v366 = vpow.pop %v365
    %v367 = vmul.f32 %v358, 1.442695
    %v368 = vpow.pop %v367
    %v369 = vmul.f32 %v359, 1.442695
    %v370 = vpow.pop %v369
    %v371 = vmul.f32 %v360, 1.442695
    %v372 = vpow.pop %v371
    %v373 = vmul.f32 %v361, 1.442695
    %v374 = vpow.pop %v373
    %v375 = vmul.f32 %v362, 1.442695
    %v376 = vpow.pop %v375
    %v377 = vmul.f32 %v363, 1.442695
    %v378 = vpow.pop %v377
    %v379 = vmul.f32 %v364, 1.442695
    %v380 = vpow.pop %v379
    %v381 = vsel %vm332, %v366, 0.0
    %382 = vadd.xlane.f32.xlu0 %v381
    %v383 = vpop.xlane.xlu0 %382
    %v384 = vsel %vm332, %v368, 0.0
    %385 = vadd.xlane.f32.xlu0 %v384
    %v386 = vpop.xlane.xlu0 %385
    %v387 = vsel %vm332, %v370, 0.0
    %388 = vadd.xlane.f32.xlu0 %v387
    %v389 = vpop.xlane.xlu0 %388
    %v390 = vsel %vm332, %v372, 0.0
    %391 = vadd.xlane.f32.xlu0 %v390
    %v392 = vpop.xlane.xlu0 %391
    %v393 = vsel %vm332, %v374, 0.0
    %394 = vadd.xlane.f32.xlu0 %v393
    %v395 = vpop.xlane.xlu0 %394
    %v396 = vsel %vm332, %v376, 0.0
    %397 = vadd.xlane.f32.xlu0 %v396
    %v398 = vpop.xlane.xlu0 %397
    %v399 = vsel %vm332, %v378, 0.0
    %400 = vadd.xlane.f32.xlu0 %v399
    %v401 = vpop.xlane.xlu0 %400
    %v402 = vsel %vm332, %v380, 0.0
    %403 = vadd.xlane.f32.xlu0 %v402
    %v404 = vpop.xlane.xlu0 %403
    %v405 = vrcp.pop %v383
    %v406 = vrcp.pop %v386
    %v407 = vrcp.pop %v389
    %v408 = vrcp.pop %v392
    %v409 = vrcp.pop %v395
    %v410 = vrcp.pop %v398
    %v411 = vrcp.pop %v401
    %v412 = vrcp.pop %v404
    %v413 = vmul.f32 %v366, %v405
    %v414 = vmul.f32 %v368, %v406
    %v415 = vmul.f32 %v370, %v407
    %v416 = vmul.f32 %v372, %v408
    %v417 = vmul.f32 %v374, %v409
    %v418 = vmul.f32 %v376, %v410
    %v419 = vmul.f32 %v378, %v411
    %v420 = vmul.f32 %v380, %v412
    %421 = vrot.lane.b32.xlu0 %v162, 64
    %v422 = vpop.permute.xlu0 %421
    %423 = vrot.lane.b32.xlu0 %v167, 64
    %v424 = vpop.permute.xlu0 %423
    %v428 = vsel %vm332, %v413, 0
    %v431 = vsel %vm332, %v414, 0
    %v434 = vsel %vm332, %v415, 0
    %v437 = vsel %vm332, %v416, 0
    %v440 = vsel %vm332, %v417, 0
    %v443 = vsel %vm332, %v418, 0
    %v446 = vsel %vm332, %v419, 0
    %v449 = vsel %vm332, %v420, 0
    %451 = vmatprep.subr.mxu0 0.0
    %452 = vmatpush1.msra.mxu0 0.0
    %453 = vmatprep.subr.mxu0 0.0
    %454 = vmatpush1.msra.mxu0 0.0
    %455 = vmatprep.subr.mxu0 0.0
    %456 = vmatpush1.msra.mxu0 0.0
    %457 = vmatprep.subr.mxu0 0.0
    %458 = vmatpush1.msra.mxu0 0.0
    %459 = vmatprep.subr.mxu0 0.0
    %460 = vmatpush1.msra.mxu0 0.0
    %461 = vmatprep.subr.mxu0 0.0
    %462 = vmatpush1.msra.mxu0 0.0
    %463 = vmatprep.subr.mxu0 0.0
    %464 = vmatpush1.msra.mxu0 0.0
    %465 = vmatprep.subr.mxu0 0.0
    %466 = vmatpush1.msra.mxu0 0.0
    %467 = vmatprep.subr.mxu0 0.0
    %468 = vmatpush1.msra.mxu0 0.0
    %469 = vmatprep.subr.mxu0 0.0
    %470 = vmatpush1.msra.mxu0 0.0
    %471 = vmatprep.subr.mxu0 0.0
    %472 = vmatpush1.msra.mxu0 0.0
    %473 = vmatprep.subr.mxu0 0.0
    %474 = vmatpush1.msra.mxu0 0.0
    %475 = vmatprep.subr.mxu0 0.0
    %476 = vmatpush1.msra.mxu0 0.0
    %477 = vmatprep.subr.mxu0 0.0
    %478 = vmatpush1.msra.mxu0 0.0
    %479 = vmatprep.subr.mxu0 0.0
    %480 = vmatpush1.msra.mxu0 %v424
    %481 = vmatprep.subr.mxu0 0.0
    %482 = vmatpush1.msra.mxu0 %v422
    %483 = vmatprep.subr.mxu0 0.0
    %484 = vmatpush2.msra.mxu0 0.0
    %485 = vmatprep.subr.mxu0 0.0
    %486 = vmatpush2.msra.mxu0 0.0
    %487 = vmatprep.subr.mxu0 0.0
    %488 = vmatpush2.msra.mxu0 0.0
    %489 = vmatprep.subr.mxu0 0.0
    %490 = vmatpush2.msra.mxu0 0.0
    %491 = vmatprep.subr.mxu0 0.0
    %492 = vmatpush2.msra.mxu0 0.0
    %493 = vmatprep.subr.mxu0 0.0
    %494 = vmatpush2.msra.mxu0 0.0
    %495 = vmatprep.subr.mxu0 0.0
    %496 = vmatpush2.msra.mxu0 0.0
    %497 = vmatprep.subr.mxu0 0.0
    %498 = vmatpush2.msra.mxu0 0.0
    %499 = vmatprep.subr.mxu0 0.0
    %500 = vmatpush2.msra.mxu0 0.0
    %501 = vmatprep.subr.mxu0 0.0
    %502 = vmatpush2.msra.mxu0 0.0
    %503 = vmatprep.subr.mxu0 0.0
    %504 = vmatpush2.msra.mxu0 0.0
    %505 = vmatprep.subr.mxu0 0.0
    %506 = vmatpush2.msra.mxu0 0.0
    %507 = vmatprep.subr.mxu0 0.0
    %508 = vmatpush2.msra.mxu0 0.0
    %509 = vmatprep.subr.mxu0 0.0
    %510 = vmatpush2.msra.mxu0 0.0
    %511 = vmatprep.subr.mxu0 0.0
    %512 = vmatpush2.msra.mxu0 0.0
    %513 = vmatprep.subr.mxu0 0.0
    %514 = vmatpush2.msra.mxu0 0.0
    %515 = vmatprep.mubr.f32.mxu0 0.0
    %516 = vmatmul.mubr.f32.gmra.mxu0 %v428
    %v517 = vpop.f32.mrf.mxu0
    %v518 = vadd.f32 0.0, %v517
    %v519 = vpop.f32.mrf.mxu0
    %520 = vmatprep.mubr.f32.mxu0 0.0
    %521 = vmatmul.mubr.f32.gmra.mxu0 %v431
    %v522 = vpop.f32.mrf.mxu0
    %v523 = vadd.f32 0.0, %v522
    %v524 = vpop.f32.mrf.mxu0
    %525 = vmatprep.mubr.f32.mxu0 0.0
    %526 = vmatmul.mubr.f32.gmra.mxu0 %v434
    %v527 = vpop.f32.mrf.mxu0
    %v528 = vadd.f32 0.0, %v527
    %v529 = vpop.f32.mrf.mxu0
    %530 = vmatprep.mubr.f32.mxu0 0.0
    %531 = vmatmul.mubr.f32.gmra.mxu0 %v437
    %v532 = vpop.f32.mrf.mxu0
    %v533 = vadd.f32 0.0, %v532
    %v534 = vpop.f32.mrf.mxu0
    %535 = vmatprep.mubr.f32.mxu0 0.0
    %536 = vmatmul.mubr.f32.gmra.mxu0 %v440
    %v537 = vpop.f32.mrf.mxu0
    %v538 = vadd.f32 0.0, %v537
    %v539 = vpop.f32.mrf.mxu0
    %540 = vmatprep.mubr.f32.mxu0 0.0
    %541 = vmatmul.mubr.f32.gmra.mxu0 %v443
    %v542 = vpop.f32.mrf.mxu0
    %v543 = vadd.f32 0.0, %v542
    %v544 = vpop.f32.mrf.mxu0
    %545 = vmatprep.mubr.f32.mxu0 0.0
    %546 = vmatmul.mubr.f32.gmra.mxu0 %v446
    %v547 = vpop.f32.mrf.mxu0
    %v548 = vadd.f32 0.0, %v547
    %v549 = vpop.f32.mrf.mxu0
    %550 = vmatprep.mubr.f32.mxu0 0.0
    %551 = vmatmul.mubr.f32.gmra.mxu0 %v449
    %v552 = vpop.f32.mrf.mxu0
    %v553 = vadd.f32 0.0, %v552
    %v554 = vpop.f32.mrf.mxu0
    %555 = vdwg.mxu0
    %v556 = vmul.f32 %v518, %v64
    %v557 = vmul.f32 %v523, %v65
    %v558 = vmul.f32 %v528, %v66
    %v559 = vmul.f32 %v533, %v67
    %v560 = vmul.f32 %v538, %v68
    %v561 = vmul.f32 %v543, %v69
    %v562 = vmul.f32 %v548, %v70
    %v563 = vmul.f32 %v553, %v71
    %v564 = vadd.f32 %v556, %v558
    %v565 = vadd.f32 %v557, %v559
    %v566 = vadd.f32 %v564, %v560
    %v567 = vadd.f32 %v565, %v561
    %v568 = vadd.f32 %v566, %v562
    %v569 = vadd.f32 %v567, %v563
    %v570 = vld [vmem:[#allocation4 + $0x20] sm:$0xff]
    %v571 = vld [vmem:[#allocation4 + $0x28] sm:$0xff]
    %v572 = vld [vmem:[#allocation4 + $0x30] sm:$0xff]
    %v573 = vld [vmem:[#allocation4 + $0x38] sm:$0xff]
    %v575 = vsel %vm88, %v568, 0
    %v578 = vsel %vm88, %v569, 0
    %580 = vmatprep.subr.mxu0 0.0
    %581 = vmatpush1.msra.mxu0 0.0
    %582 = vmatprep.subr.mxu0 0.0
    %583 = vmatpush1.msra.mxu0 0.0
    %584 = vmatprep.subr.mxu0 0.0
    %585 = vmatpush1.msra.mxu0 0.0
    %586 = vmatprep.subr.mxu0 0.0
    %587 = vmatpush1.msra.mxu0 0.0
    %588 = vmatprep.subr.mxu0 0.0
    %589 = vmatpush1.msra.mxu0 0.0
    %590 = vmatprep.subr.mxu0 0.0
    %591 = vmatpush1.msra.mxu0 0.0
    %592 = vmatprep.subr.mxu0 0.0
    %593 = vmatpush1.msra.mxu0 0.0
    %594 = vmatprep.subr.mxu0 0.0
    %595 = vmatpush1.msra.mxu0 0.0
    %596 = vmatprep.subr.mxu0 0.0
    %597 = vmatpush1.msra.mxu0 0.0
    %598 = vmatprep.subr.mxu0 0.0
    %599 = vmatpush1.msra.mxu0 0.0
    %600 = vmatprep.subr.mxu0 0.0
    %601 = vmatpush1.msra.mxu0 0.0
    %602 = vmatprep.subr.mxu0 0.0
    %603 = vmatpush1.msra.mxu0 0.0
    %604 = vmatprep.subr.mxu0 0.0
    %605 = vmatpush1.msra.mxu0 %v573
    %606 = vmatprep.subr.mxu0 0.0
    %607 = vmatpush1.msra.mxu0 %v572
    %608 = vmatprep.subr.mxu0 0.0
    %609 = vmatpush1.msra.mxu0 %v571
    %610 = vmatprep.subr.mxu0 0.0
    %611 = vmatpush1.msra.mxu0 %v570
    %612 = vmatprep.subr.mxu0 0.0
    %613 = vmatpush2.msra.mxu0 0.0
    %614 = vmatprep.subr.mxu0 0.0
    %615 = vmatpush2.msra.mxu0 0.0
    %616 = vmatprep.subr.mxu0 0.0
    %617 = vmatpush2.msra.mxu0 0.0
    %618 = vmatprep.subr.mxu0 0.0
    %619 = vmatpush2.msra.mxu0 0.0
    %620 = vmatprep.subr.mxu0 0.0
    %621 = vmatpush2.msra.mxu0 0.0
    %622 = vmatprep.subr.mxu0 0.0
    %623 = vmatpush2.msra.mxu0 0.0
    %624 = vmatprep.subr.mxu0 0.0
    %625 = vmatpush2.msra.mxu0 0.0
    %626 = vmatprep.subr.mxu0 0.0
    %627 = vmatpush2.msra.mxu0 0.0
    %628 = vmatprep.subr.mxu0 0.0
    %629 = vmatpush2.msra.mxu0 0.0
    %630 = vmatprep.subr.mxu0 0.0
    %631 = vmatpush2.msra.mxu0 0.0
    %632 = vmatprep.subr.mxu0 0.0
    %633 = vmatpush2.msra.mxu0 0.0
    %634 = vmatprep.subr.mxu0 0.0
    %635 = vmatpush2.msra.mxu0 0.0
    %636 = vmatprep.subr.mxu0 0.0
    %637 = vmatpush2.msra.mxu0 0.0
    %638 = vmatprep.subr.mxu0 0.0
    %639 = vmatpush2.msra.mxu0 0.0
    %640 = vmatprep.subr.mxu0 0.0
    %641 = vmatpush2.msra.mxu0 0.0
    %642 = vmatprep.subr.mxu0 0.0
    %643 = vmatpush2.msra.mxu0 0.0
    %644 = vmatprep.mubr.f32.mxu0 0.0
    %645 = vmatmul.mubr.f32.gmra.mxu0 %v575
    %v646 = vpop.f32.mrf.mxu0
    %v647 = vadd.f32 0.0, %v646
    %v648 = vpop.f32.mrf.mxu0
    %649 = vmatprep.mubr.f32.mxu0 0.0
    %650 = vmatmul.mubr.f32.gmra.mxu0 %v578
    %v651 = vpop.f32.mrf.mxu0
    %v652 = vadd.f32 0.0, %v651
    %v653 = vpop.f32.mrf.mxu0
    %654 = vdwg.mxu0
    %v655 = vlaneseq
    %v656 = vshrl.u32 %v655, 7
    %v657 = vsub.s32 1, %v656
    %v658 = vrot.slane %v63, %v657
    %v659 = vadd.f32 %v647, %v658
    %v660 = vadd.f32 %v652, %v658
    %v661 = vadd.f32 %v659, %v61
    %v662 = vadd.f32 %v660, %v62
    %v663 = vsel %vm88, %v661, 0.0
    %664 = vadd.xlane.f32.xlu0 %v663
    %v665 = vpop.xlane.xlu0 %664
    %v666 = vsel %vm88, %v662, 0.0
    %667 = vadd.xlane.f32.xlu0 %v666
    %v668 = vpop.xlane.xlu0 %667
    %v669 = vrcp.pop 32.0
    %v670 = vmul.f32 %v665, %v669
    %v671 = vmul.f32 %v668, %v669
    %v672 = vsub.f32 %v661, %v670
    %v673 = vsub.f32 %v662, %v671
    %v674 = vmul.f32 %v672, %v672
    %v675 = vmul.f32 %v673, %v673
    %v676 = vsel %vm88, %v674, 0.0
    %677 = vadd.xlane.f32.xlu0 %v676
    %v678 = vpop.xlane.xlu0 %677
    %v679 = vsel %vm88, %v675, 0.0
    %680 = vadd.xlane.f32.xlu0 %v679
    %v681 = vpop.xlane.xlu0 %680
    %v682 = vmul.f32 %v678, %v669
    %v683 = vmul.f32 %v681, %v669
    %v684 = vadd.f32 %v682, 1e-12
    %v685 = vadd.f32 %v683, 1e-12
    %v686 = vrsqrt.pop %v684
    %v687 = vrsqrt.pop %v685
    %v688 = vmul.f32 %v672, %v686
    %v689 = vmul.f32 %v673, %v687
    %v690 = vlaneseq
    %v691 = vshrl.u32 %v690, 7
    %v692 = vsub.s32 2, %v691
    %v693 = vrot.slane %v63, %v692
    %v694 = vmul.f32 %v688, %v693
    %v695 = vmul.f32 %v689, %v693
    %v696 = vlaneseq
    %v697 = vshrl.u32 %v696, 7
    %v698 = vsub.s32 3, %v697
    %v699 = vrot.slane %v63, %v698
    %v700 = vadd.f32 %v694, %v699
    %v701 = vadd.f32 %v695, %v699
    %v702 = vld [vmem:[#allocation4 + $0x40] sm:$0xff]
    %v703 = vld [vmem:[#allocation4 + $0x48] sm:$0xff]
    %v704 = vld [vmem:[#allocation4 + $0x50] sm:$0xff]
    %v705 = vld [vmem:[#allocation4 + $0x58] sm:$0xff]
    %v706 = vlaneseq
    %v707 = vshrl.u32 %v706, 7
    %v708 = vsub.s32 4, %v707
    %v709 = vrot.slane %v63, %v708
    %v711 = vsel %vm88, %v700, 0
    %v714 = vsel %vm88, %v701, 0
    %716 = vmatprep.subr.mxu0 0.0
    %717 = vmatpush1.msra.mxu0 0.0
    %718 = vmatprep.subr.mxu0 0.0
    %719 = vmatpush1.msra.mxu0 0.0
    %720 = vmatprep.subr.mxu0 0.0
    %721 = vmatpush1.msra.mxu0 0.0
    %722 = vmatprep.subr.mxu0 0.0
    %723 = vmatpush1.msra.mxu0 0.0
    %724 = vmatprep.subr.mxu0 0.0
    %725 = vmatpush1.msra.mxu0 0.0
    %726 = vmatprep.subr.mxu0 0.0
    %727 = vmatpush1.msra.mxu0 0.0
    %728 = vmatprep.subr.mxu0 0.0
    %729 = vmatpush1.msra.mxu0 0.0
    %730 = vmatprep.subr.mxu0 0.0
    %731 = vmatpush1.msra.mxu0 0.0
    %732 = vmatprep.subr.mxu0 0.0
    %733 = vmatpush1.msra.mxu0 0.0
    %734 = vmatprep.subr.mxu0 0.0
    %735 = vmatpush1.msra.mxu0 0.0
    %736 = vmatprep.subr.mxu0 0.0
    %737 = vmatpush1.msra.mxu0 0.0
    %738 = vmatprep.subr.mxu0 0.0
    %739 = vmatpush1.msra.mxu0 0.0
    %740 = vmatprep.subr.mxu0 0.0
    %741 = vmatpush1.msra.mxu0 %v705
    %742 = vmatprep.subr.mxu0 0.0
    %743 = vmatpush1.msra.mxu0 %v704
    %744 = vmatprep.subr.mxu0 0.0
    %745 = vmatpush1.msra.mxu0 %v703
    %746 = vmatprep.subr.mxu0 0.0
    %747 = vmatpush1.msra.mxu0 %v702
    %748 = vmatprep.subr.mxu0 0.0
    %749 = vmatpush2.msra.mxu0 0.0
    %750 = vmatprep.subr.mxu0 0.0
    %751 = vmatpush2.msra.mxu0 0.0
    %752 = vmatprep.subr.mxu0 0.0
    %753 = vmatpush2.msra.mxu0 0.0
    %754 = vmatprep.subr.mxu0 0.0
    %755 = vmatpush2.msra.mxu0 0.0
    %756 = vmatprep.subr.mxu0 0.0
    %757 = vmatpush2.msra.mxu0 0.0
    %758 = vmatprep.subr.mxu0 0.0
    %759 = vmatpush2.msra.mxu0 0.0
    %760 = vmatprep.subr.mxu0 0.0
    %761 = vmatpush2.msra.mxu0 0.0
    %762 = vmatprep.subr.mxu0 0.0
    %763 = vmatpush2.msra.mxu0 0.0
    %764 = vmatprep.subr.mxu0 0.0
    %765 = vmatpush2.msra.mxu0 0.0
    %766 = vmatprep.subr.mxu0 0.0
    %767 = vmatpush2.msra.mxu0 0.0
    %768 = vmatprep.subr.mxu0 0.0
    %769 = vmatpush2.msra.mxu0 0.0
    %770 = vmatprep.subr.mxu0 0.0
    %771 = vmatpush2.msra.mxu0 0.0
    %772 = vmatprep.subr.mxu0 0.0
    %773 = vmatpush2.msra.mxu0 0.0
    %774 = vmatprep.subr.mxu0 0.0
    %775 = vmatpush2.msra.mxu0 0.0
    %776 = vmatprep.subr.mxu0 0.0
    %777 = vmatpush2.msra.mxu0 0.0
    %778 = vmatprep.subr.mxu0 0.0
    %779 = vmatpush2.msra.mxu0 0.0
    %780 = vmatprep.mubr.f32.mxu0 0.0
    %781 = vmatmul.mubr.f32.gmra.mxu0 %v711
    %v782 = vpop.f32.mrf.mxu0
    %v783 = vadd.f32 %v709, %v782
    %v784 = vpop.f32.mrf.mxu0
    %785 = vmatprep.mubr.f32.mxu0 0.0
    %786 = vmatmul.mubr.f32.gmra.mxu0 %v714
    %v787 = vpop.f32.mrf.mxu0
    %v788 = vadd.f32 %v709, %v787
    %v789 = vpop.f32.mrf.mxu0
    %790 = vdwg.mxu0
    %v791 = vmul.f32 %v783, 0.5
    %v792 = vmul.f32 %v788, 0.5
    %v793 = vmul.f32 %v783, 0.70710677
    %v794 = vmul.f32 %v788, 0.70710677
    %v795 = verf.f32.pop %v793
    %v796 = verf.f32.pop %v794
    %v797 = vadd.f32 %v795, 1.0
    %v798 = vadd.f32 %v796, 1.0
    %v799 = vmul.f32 %v791, %v797
    %v800 = vmul.f32 %v792, %v798
    %v801 = vld [vmem:[#allocation4 + $0x60] sm:$0xff]
    %v802 = vld [vmem:[#allocation4 + $0x68] sm:$0xff]
    %v803 = vld [vmem:[#allocation4 + $0x70] sm:$0xff]
    %v804 = vld [vmem:[#allocation4 + $0x78] sm:$0xff]
    %v805 = vld [vmem:[#allocation4 + $0x80] sm:$0xff]
    %v806 = vld [vmem:[#allocation4 + $0x88] sm:$0xff]
    %v807 = vld [vmem:[#allocation4 + $0x90] sm:$0xff]
    %v808 = vld [vmem:[#allocation4 + $0x98] sm:$0xff]
    %vm809 = vcmask 523264
    %v811 = vsel %vm809, %v799, 0
    %v814 = vsel %vm809, %v800, 0
    %816 = vmatprep.subr.mxu0 0.0
    %817 = vmatpush1.msra.mxu0 0.0
    %818 = vmatprep.subr.mxu0 0.0
    %819 = vmatpush1.msra.mxu0 0.0
    %820 = vmatprep.subr.mxu0 0.0
    %821 = vmatpush1.msra.mxu0 0.0
    %822 = vmatprep.subr.mxu0 0.0
    %823 = vmatpush1.msra.mxu0 0.0
    %824 = vmatprep.subr.mxu0 0.0
    %825 = vmatpush1.msra.mxu0 0.0
    %826 = vmatprep.subr.mxu0 0.0
    %827 = vmatpush1.msra.mxu0 0.0
    %828 = vmatprep.subr.mxu0 0.0
    %829 = vmatpush1.msra.mxu0 0.0
    %830 = vmatprep.subr.mxu0 0.0
    %831 = vmatpush1.msra.mxu0 0.0
    %832 = vmatprep.subr.mxu0 0.0
    %833 = vmatpush1.msra.mxu0 %v808
    %834 = vmatprep.subr.mxu0 0.0
    %835 = vmatpush1.msra.mxu0 %v807
    %836 = vmatprep.subr.mxu0 0.0
    %837 = vmatpush1.msra.mxu0 %v806
    %838 = vmatprep.subr.mxu0 0.0
    %839 = vmatpush1.msra.mxu0 %v805
    %840 = vmatprep.subr.mxu0 0.0
    %841 = vmatpush1.msra.mxu0 %v804
    %842 = vmatprep.subr.mxu0 0.0
    %843 = vmatpush1.msra.mxu0 %v803
    %844 = vmatprep.subr.mxu0 0.0
    %845 = vmatpush1.msra.mxu0 %v802
    %846 = vmatprep.subr.mxu0 0.0
    %847 = vmatpush1.msra.mxu0 %v801
    %848 = vmatprep.subr.mxu0 0.0
    %849 = vmatpush2.msra.mxu0 0.0
    %850 = vmatprep.subr.mxu0 0.0
    %851 = vmatpush2.msra.mxu0 0.0
    %852 = vmatprep.subr.mxu0 0.0
    %853 = vmatpush2.msra.mxu0 0.0
    %854 = vmatprep.subr.mxu0 0.0
    %855 = vmatpush2.msra.mxu0 0.0
    %856 = vmatprep.subr.mxu0 0.0
    %857 = vmatpush2.msra.mxu0 0.0
    %858 = vmatprep.subr.mxu0 0.0
    %859 = vmatpush2.msra.mxu0 0.0
    %860 = vmatprep.subr.mxu0 0.0
    %861 = vmatpush2.msra.mxu0 0.0
    %862 = vmatprep.subr.mxu0 0.0
    %863 = vmatpush2.msra.mxu0 0.0
    %864 = vmatprep.subr.mxu0 0.0
    %865 = vmatpush2.msra.mxu0 0.0
    %866 = vmatprep.subr.mxu0 0.0
    %867 = vmatpush2.msra.mxu0 0.0
    %868 = vmatprep.subr.mxu0 0.0
    %869 = vmatpush2.msra.mxu0 0.0
    %870 = vmatprep.subr.mxu0 0.0
    %871 = vmatpush2.msra.mxu0 0.0
    %872 = vmatprep.subr.mxu0 0.0
    %873 = vmatpush2.msra.mxu0 0.0
    %874 = vmatprep.subr.mxu0 0.0
    %875 = vmatpush2.msra.mxu0 0.0
    %876 = vmatprep.subr.mxu0 0.0
    %877 = vmatpush2.msra.mxu0 0.0
    %878 = vmatprep.subr.mxu0 0.0
    %879 = vmatpush2.msra.mxu0 0.0
    %880 = vmatprep.mubr.f32.mxu0 0.0
    %881 = vmatmul.mubr.f32.gmra.mxu0 %v811
    %v882 = vpop.f32.mrf.mxu0
    %v883 = vadd.f32 0.0, %v882
    %v884 = vpop.f32.mrf.mxu0
    %885 = vmatprep.mubr.f32.mxu0 0.0
    %886 = vmatmul.mubr.f32.gmra.mxu0 %v814
    %v887 = vpop.f32.mrf.mxu0
    %v888 = vadd.f32 0.0, %v887
    %v889 = vpop.f32.mrf.mxu0
    %890 = vdwg.mxu0
    %v891 = vlaneseq
    %v892 = vshrl.u32 %v891, 7
    %v893 = vsub.s32 5, %v892
    %v894 = vrot.slane %v63, %v893
    %v895 = vadd.f32 %v883, %v894
    %v896 = vadd.f32 %v888, %v894
    %v897 = vadd.f32 %v895, %v700
    %v898 = vadd.f32 %v896, %v701
    %v899 = vsel %vm88, %v897, 0.0
    %900 = vadd.xlane.f32.xlu0 %v899
    %v901 = vpop.xlane.xlu0 %900
    %v902 = vsel %vm88, %v898, 0.0
    %903 = vadd.xlane.f32.xlu0 %v902
    %v904 = vpop.xlane.xlu0 %903
    %v905 = vmul.f32 %v901, %v669
    %v906 = vmul.f32 %v904, %v669
    %v907 = vsub.f32 %v897, %v905
    %v908 = vsub.f32 %v898, %v906
    %v909 = vmul.f32 %v907, %v907
    %v910 = vmul.f32 %v908, %v908
    %v911 = vsel %vm88, %v909, 0.0
    %912 = vadd.xlane.f32.xlu0 %v911
    %v913 = vpop.xlane.xlu0 %912
    %v914 = vsel %vm88, %v910, 0.0
    %915 = vadd.xlane.f32.xlu0 %v914
    %v916 = vpop.xlane.xlu0 %915
    %v917 = vmul.f32 %v913, %v669
    %v918 = vmul.f32 %v916, %v669
    %v919 = vadd.f32 %v917, 1e-12
    %v920 = vadd.f32 %v918, 1e-12
    %v921 = vrsqrt.pop %v919
    %v922 = vrsqrt.pop %v920
    %v923 = vmul.f32 %v907, %v921
    %v924 = vmul.f32 %v908, %v922
    %v925 = vld [vmem:[#allocation4 + $0xa0] sm:$0xff]
    %v926 = vld [vmem:[#allocation4 + $0xa8] sm:$0xff]
    %v927 = vld [vmem:[#allocation4 + $0xb0] sm:$0xff]
    %v928 = vld [vmem:[#allocation4 + $0xb8] sm:$0xff]
    %v929 = vlaneseq
    %v930 = vshrl.u32 %v929, 7
    %v931 = vsub.s32 6, %v930
    %v932 = vrot.slane %v63, %v931
    %v934 = vsel %vm88, %v923, 0
    %v937 = vsel %vm88, %v924, 0
    %939 = vmatprep.subr.mxu0 0.0
    %940 = vmatpush1.msra.mxu0 0.0
    %941 = vmatprep.subr.mxu0 0.0
    %942 = vmatpush1.msra.mxu0 0.0
    %943 = vmatprep.subr.mxu0 0.0
    %944 = vmatpush1.msra.mxu0 0.0
    %945 = vmatprep.subr.mxu0 0.0
    %946 = vmatpush1.msra.mxu0 0.0
    %947 = vmatprep.subr.mxu0 0.0
    %948 = vmatpush1.msra.mxu0 0.0
    %949 = vmatprep.subr.mxu0 0.0
    %950 = vmatpush1.msra.mxu0 0.0
    %951 = vmatprep.subr.mxu0 0.0
    %952 = vmatpush1.msra.mxu0 0.0
    %953 = vmatprep.subr.mxu0 0.0
    %954 = vmatpush1.msra.mxu0 0.0
    %955 = vmatprep.subr.mxu0 0.0
    %956 = vmatpush1.msra.mxu0 0.0
    %957 = vmatprep.subr.mxu0 0.0
    %958 = vmatpush1.msra.mxu0 0.0
    %959 = vmatprep.subr.mxu0 0.0
    %960 = vmatpush1.msra.mxu0 0.0
    %961 = vmatprep.subr.mxu0 0.0
    %962 = vmatpush1.msra.mxu0 0.0
    %963 = vmatprep.subr.mxu0 0.0
    %964 = vmatpush1.msra.mxu0 %v928
    %965 = vmatprep.subr.mxu0 0.0
    %966 = vmatpush1.msra.mxu0 %v927
    %967 = vmatprep.subr.mxu0 0.0
    %968 = vmatpush1.msra.mxu0 %v926
    %969 = vmatprep.subr.mxu0 0.0
    %970 = vmatpush1.msra.mxu0 %v925
    %971 = vmatprep.subr.mxu0 0.0
    %972 = vmatpush2.msra.mxu0 0.0
    %973 = vmatprep.subr.mxu0 0.0
    %974 = vmatpush2.msra.mxu0 0.0
    %975 = vmatprep.subr.mxu0 0.0
    %976 = vmatpush2.msra.mxu0 0.0
    %977 = vmatprep.subr.mxu0 0.0
    %978 = vmatpush2.msra.mxu0 0.0
    %979 = vmatprep.subr.mxu0 0.0
    %980 = vmatpush2.msra.mxu0 0.0
    %981 = vmatprep.subr.mxu0 0.0
    %982 = vmatpush2.msra.mxu0 0.0
    %983 = vmatprep.subr.mxu0 0.0
    %984 = vmatpush2.msra.mxu0 0.0
    %985 = vmatprep.subr.mxu0 0.0
    %986 = vmatpush2.msra.mxu0 0.0
    %987 = vmatprep.subr.mxu0 0.0
    %988 = vmatpush2.msra.mxu0 0.0
    %989 = vmatprep.subr.mxu0 0.0
    %990 = vmatpush2.msra.mxu0 0.0
    %991 = vmatprep.subr.mxu0 0.0
    %992 = vmatpush2.msra.mxu0 0.0
    %993 = vmatprep.subr.mxu0 0.0
    %994 = vmatpush2.msra.mxu0 0.0
    %995 = vmatprep.subr.mxu0 0.0
    %996 = vmatpush2.msra.mxu0 0.0
    %997 = vmatprep.subr.mxu0 0.0
    %998 = vmatpush2.msra.mxu0 0.0
    %999 = vmatprep.subr.mxu0 0.0
    %1000 = vmatpush2.msra.mxu0 0.0
    %1001 = vmatprep.subr.mxu0 0.0
    %1002 = vmatpush2.msra.mxu0 0.0
    %1003 = vmatprep.mubr.f32.mxu0 0.0
    %1004 = vmatmul.mubr.f32.gmra.mxu0 %v934
    %v1005 = vpop.f32.mrf.mxu0
    %v1006 = vadd.f32 %v932, %v1005
    %v1007 = vpop.f32.mrf.mxu0
    %1008 = vmatprep.mubr.f32.mxu0 0.0
    %1009 = vmatmul.mubr.f32.gmra.mxu0 %v937
    %v1010 = vpop.f32.mrf.mxu0
    %v1011 = vadd.f32 %v932, %v1010
    %v1012 = vpop.f32.mrf.mxu0
    %1013 = vdwg.mxu0
    %1014 = vst [vmem:[%s5] sm:$0xff] %v1006
    %1015 = vst [vmem:[%s5 + $0x8] sm:$0xff] %v1011
    // Predicated region
    $region34: #{transformer_block.1} parent=1 // pred_check
      _
    $region35: #{transformer_block.1} parent=1 // pred_check_branch
      %1017 = sbr.rel (0) target = $region37
    $region36: #{transformer_block.1} parent=1 // pred_region
      _
    $region37: #{transformer_block.1} parent=1 // pred_fallthru
      _
    // Predicated region
    $region38: #{transformer_block.1} parent=1 // pred_check
      _
    $region39: #{transformer_block.1} parent=1 // pred_check_branch
      %1019 = sbr.rel (0) target = $region41
    $region40: #{transformer_block.1} parent=1 // pred_region
      _
    $region41: #{transformer_block.1} parent=1 // pred_fallthru
      _
    %1020 = vsyncpa [#allocation3], 1
    %1021 = vsyncpa [#allocation5], 1

</llo_original>
